<compile_context>
chip_gen: v5e
topology: v5e:2x2
jax: 0.10.0
libtpu: 0.0.40
codegen_flags: <defaults>
</compile_context>

<pallas_src>
import jax
import jax.numpy as jnp
from jax.experimental import pallas as pl
from jax.experimental.pallas import tpu as pltpu

IN_DIM = 8
HIDDEN = 32
DIMENSION = 16          # const.dimension
NUM_MLPS = 4


def _dnn_kernel(x_ref, w1_ref, b1_ref, w2_ref, b2_ref, out_ref):
    """out = tanh(x @ W1cat + b1cat) @ W2_alpha + b2_alpha  (one batch tile)."""
    h = jnp.tanh(
        jnp.dot(x_ref[...], w1_ref[...], preferred_element_type=jnp.float32)
        + b1_ref[...]                                   # (1, 4*HIDDEN) broadcasts over B
    )
    out_ref[...] = (
        jnp.dot(h, w2_ref[...], preferred_element_type=jnp.float32)
        + b2_ref[...]                                   # (1, NA*DIM)
    ).astype(out_ref.dtype)


def dnn_forward(x, params, alpha_list):
    w1, b1, w2, b2 = params                             # (4,IN,H), (4,1,H), (4,H,D), (4,1,D)
    B = x.shape[0]
    NA = len(alpha_list)

    # Static alpha powers: alphas[a, m] = alpha_a ** m
    alphas = jnp.asarray(
        [[float(a) ** m for m in range(NUM_MLPS)] for a in alpha_list],
        dtype=jnp.float32,
    )                                                    # (NA, 4)

    # ---- Layer-1 fusion: (IN_DIM, 4*HIDDEN), (1, 4*HIDDEN) -------------------
    w1cat = jnp.transpose(w1, (1, 0, 2)).reshape(IN_DIM, NUM_MLPS * HIDDEN)
    b1cat = b1.reshape(1, NUM_MLPS * HIDDEN)             # m-major, matches w1cat columns

    # ---- Layer-2 + alpha fusion: (4*HIDDEN, NA*DIM), (1, NA*DIM) -------------
    w2_scaled = alphas[:, :, None, None] * w2[None]      # (NA, 4, H, D)
    w2a = jnp.transpose(w2_scaled, (1, 2, 0, 3)).reshape(
        NUM_MLPS * HIDDEN, NA * DIMENSION)               # rows (m,h), cols (a,d) a-major
    b2a = (alphas @ b2.reshape(NUM_MLPS, DIMENSION)).reshape(1, NA * DIMENSION)

    # ---- Batch tiling ---------------------------------------------------------
    TB = B if B <= 256 else 256                          # multiple of 8 when tiling kicks in
    grid = (pl.cdiv(B, TB),)

    out = pl.pallas_call(
        _dnn_kernel,
        out_shape=jax.ShapeDtypeStruct((B, NA * DIMENSION), jnp.float32),
        grid_spec=pl.GridSpec(
            grid=grid,
            in_specs=[
                pl.BlockSpec((TB, IN_DIM), lambda i: (i, 0)),     # streamed per tile
                pl.BlockSpec(w1cat.shape, lambda i: (0, 0)),      # VMEM-resident weights
                pl.BlockSpec(b1cat.shape, lambda i: (0, 0)),
                pl.BlockSpec(w2a.shape, lambda i: (0, 0)),
                pl.BlockSpec(b2a.shape, lambda i: (0, 0)),
            ],
            out_specs=pl.BlockSpec((TB, NA * DIMENSION), lambda i: (i, 0)),
        ),
        compiler_params=pltpu.CompilerParams(
            dimension_semantics=("parallel",),           # shards batch tiles across TCs on v7x
        ),
    )(x, w1cat, b1cat, w2a, b2a)

    # Lane-dense (B, NA*DIM) -> (B, NA, DIM, 1): pure reshape, no transpose copy.
    return out.reshape(B, NA, DIMENSION, 1)


def _reference_forward(x, params, alpha_list):
    """Pure-JAX reference reproducing the PyTorch semantics (in float32)."""
    w1, b1, w2, b2 = params
    us = []
    for m in range(NUM_MLPS):
        h = jnp.tanh(x @ w1[m] + b1[m])
        u = h @ w2[m] + b2[m]                            # (B, DIM)
        us.append(u[:, None, :, None])                   # (B, 1, DIM, 1)
    res = []
    for alpha in alpha_list:
        y = jnp.zeros_like(us[0])
        for idx, u in enumerate(us):
            y = y + u * (alpha ** idx)
        res.append(y)
    return jnp.concatenate(res, axis=1)                  # (B, NA, DIM, 1)


if __name__ == "__main__":
    key = jax.random.PRNGKey(0)
    k_x, k_w1, k_b1, k_w2, k_b2 = jax.random.split(key, 5)

    B = 2
    x = jax.random.normal(k_x, (B, IN_DIM), dtype=jnp.float32)

    # Deterministic synthetic parameters for the 4 stacked MLPs.
    w1 = 0.1 * jax.random.normal(k_w1, (NUM_MLPS, IN_DIM, HIDDEN), dtype=jnp.float32)
    b1 = 0.1 * jax.random.normal(k_b1, (NUM_MLPS, 1, HIDDEN), dtype=jnp.float32)
    w2 = 0.1 * jax.random.normal(k_w2, (NUM_MLPS, HIDDEN, DIMENSION), dtype=jnp.float32)
    b2 = 0.1 * jax.random.normal(k_b2, (NUM_MLPS, 1, DIMENSION), dtype=jnp.float32)

    alpha_list = [0.5, 1.0, 2.0]
    params = (w1, b1, w2, b2)

    out = dnn_forward(x, params, alpha_list)
    out = jax.block_until_ready(out)

    ref = _reference_forward(x, params, alpha_list)
    assert out.shape == (B, len(alpha_list), DIMENSION, 1), out.shape
    assert jnp.allclose(out, ref, atol=1e-5, rtol=1e-5), "mismatch vs reference"

    print("KERNEL_OK")
</pallas_src>

<mosaic_0001>
module attributes {stable_mosaic.version = 11 : i64} {
  func.func @_dnn_kernel(%arg0: i32, %arg1: memref<2x8xf32, #tpu.memory_space<vmem>>, %arg2: memref<8x128xf32, #tpu.memory_space<vmem>>, %arg3: memref<1x128xf32, #tpu.memory_space<vmem>>, %arg4: memref<128x48xf32, #tpu.memory_space<vmem>>, %arg5: memref<1x48xf32, #tpu.memory_space<vmem>>, %arg6: memref<2x48xf32, #tpu.memory_space<vmem>>) attributes {dimension_semantics = [#tpu.dimension_semantics<parallel>], iteration_bounds = array<i64: 1>, scalar_prefetch = 0 : i64, scratch_operands = 0 : i64, tpu.core_type = #tpu.core_type<tc>, window_params = [{transform_indices = @transform_0, window_bounds = array<i64: 2, 8>}, {pipeline_mode = #tpu.pipeline_mode<synchronous>, transform_indices = @transform_1, window_bounds = array<i64: 8, 128>}, {pipeline_mode = #tpu.pipeline_mode<synchronous>, transform_indices = @transform_2, window_bounds = array<i64: 1, 128>}, {pipeline_mode = #tpu.pipeline_mode<synchronous>, transform_indices = @transform_3, window_bounds = array<i64: 128, 48>}, {pipeline_mode = #tpu.pipeline_mode<synchronous>, transform_indices = @transform_4, window_bounds = array<i64: 1, 48>}, {transform_indices = @transform_5, window_bounds = array<i64: 2, 48>}]} {
    %c0 = arith.constant 0 : index
    %c0_0 = arith.constant 0 : index
    %0 = vector.load %arg1[%c0, %c0_0] : memref<2x8xf32, #tpu.memory_space<vmem>>, vector<2x8xf32>
    %c0_1 = arith.constant 0 : index
    %c0_2 = arith.constant 0 : index
    %1 = vector.load %arg2[%c0_1, %c0_2] : memref<8x128xf32, #tpu.memory_space<vmem>>, vector<8x128xf32>
    %cst = arith.constant dense<0.000000e+00> : vector<2x128xf32>
    %2 = tpu.matmul %0, %1, %cst {dimension_numbers = #tpu.dot_dimension_numbers<[1], [0], [0], [1], [0, 0, 1, 1], [], []>} : vector<2x8xf32>, vector<8x128xf32>, vector<2x128xf32> -> vector<2x128xf32>
    %c0_3 = arith.constant 0 : index
    %c0_4 = arith.constant 0 : index
    %3 = vector.load %arg3[%c0_3, %c0_4] : memref<1x128xf32, #tpu.memory_space<vmem>>, vector<1x128xf32>
    %4 = vector.broadcast %3 : vector<1x128xf32> to vector<2x128xf32>
    %5 = arith.addf %2, %4 : vector<2x128xf32>
    %6 = math.tanh %5 : vector<2x128xf32>
    %c0_5 = arith.constant 0 : index
    %c0_6 = arith.constant 0 : index
    %7 = vector.load %arg4[%c0_5, %c0_6] : memref<128x48xf32, #tpu.memory_space<vmem>>, vector<128x48xf32>
    %cst_7 = arith.constant dense<0.000000e+00> : vector<2x48xf32>
    %8 = tpu.matmul %6, %7, %cst_7 {dimension_numbers = #tpu.dot_dimension_numbers<[1], [0], [0], [1], [0, 0, 1, 1], [], []>} : vector<2x128xf32>, vector<128x48xf32>, vector<2x48xf32> -> vector<2x48xf32>
    %c0_8 = arith.constant 0 : index
    %c0_9 = arith.constant 0 : index
    %9 = vector.load %arg5[%c0_8, %c0_9] : memref<1x48xf32, #tpu.memory_space<vmem>>, vector<1x48xf32>
    %10 = vector.broadcast %9 : vector<1x48xf32> to vector<2x48xf32>
    %11 = arith.addf %8, %10 : vector<2x48xf32>
    %c0_10 = arith.constant 0 : index
    %c0_11 = arith.constant 0 : index
    %12 = vector.load %arg6[%c0_10, %c0_11] : memref<2x48xf32, #tpu.memory_space<vmem>>, vector<2x48xf32>
    tpu.vector_store %arg6[%c0_10, %c0_11], %11 {strides = array<i32>} : memref<2x48xf32, #tpu.memory_space<vmem>>, vector<2x48xf32>,
    return
  }
  func.func @transform_0(%arg0: i32) -> (i32, i32) {
    %c0_i32 = arith.constant 0 : i32
    %c0_i32_0 = arith.constant 0 : i32
    return %arg0, %c0_i32 : i32, i32
  }
  func.func @transform_1(%arg0: i32) -> (i32, i32) {
    %c0_i32 = arith.constant 0 : i32
    %c0_i32_0 = arith.constant 0 : i32
    %c0_i32_1 = arith.constant 0 : i32
    return %c0_i32, %c0_i32_0 : i32, i32
  }
  func.func @transform_2(%arg0: i32) -> (i32, i32) {
    %c0_i32 = arith.constant 0 : i32
    %c0_i32_0 = arith.constant 0 : i32
    %c0_i32_1 = arith.constant 0 : i32
    return %c0_i32, %c0_i32_0 : i32, i32
  }
  func.func @transform_3(%arg0: i32) -> (i32, i32) {
    %c0_i32 = arith.constant 0 : i32
    %c0_i32_0 = arith.constant 0 : i32
    %c0_i32_1 = arith.constant 0 : i32
    return %c0_i32, %c0_i32_0 : i32, i32
  }
  func.func @transform_4(%arg0: i32) -> (i32, i32) {
    %c0_i32 = arith.constant 0 : i32
    %c0_i32_0 = arith.constant 0 : i32
    %c0_i32_1 = arith.constant 0 : i32
    return %c0_i32, %c0_i32_0 : i32, i32
  }
  func.func @transform_5(%arg0: i32) -> (i32, i32) {
    %c0_i32 = arith.constant 0 : i32
    %c0_i32_0 = arith.constant 0 : i32
    return %arg0, %c0_i32 : i32, i32
  }
}

</mosaic_0001>

<llo_original>
// kernel: tpu_custom_call.1
$region0: #{tpu_custom_call.1}
  #allocation0 [shape = 'u32[]', space=smem, size = 0x4, offset = 0x4, fixed_abs, tag = 'smem constant byte address 0x4 - core index']
  #allocation1 [shape = 'u32[72,128]{1,0:T(1,128)}', space=vmem, size = 0x9000, scoped, tag = 'internal scratch']
  %s0 = inlined_call_operand.vmem [shape: f32[2,8], index: 0, kind: input, shape index: {}]
  %s1 = inlined_call_operand.vmem [shape: f32[8,128], index: 1, kind: input, shape index: {}]
  %s2 = inlined_call_operand.vmem [shape: f32[1,128], index: 2, kind: input, shape index: {}]
  %s3 = inlined_call_operand.vmem [shape: f32[128,48], index: 3, kind: input, shape index: {}]
  %s4 = inlined_call_operand.vmem [shape: f32[1,48], index: 4, kind: input, shape index: {}]
  %s5 = inlined_call_operand.hbm [shape: f32[2,48], index: 5, kind: output, shape index: {}]
  %s6 = sld [smem:[#allocation0]]
  $region30: #{tpu_custom_call.1} parent=0
    _
  %s8 = ssub.s32 1, %s6
  %s9 = scalar_select 0, %s8, %s6
  $region1: #{tpu_custom_call.1} parent=0
    #allocation2 [shape = 'u8[1024]{0}', space=vmem, size = 0x400, scoped, tag = 'output window, operand 0, single buffered']
    #allocation3 [shape = 's32[1]{0}', space=sflag, size = 0x4, scoped, tag = 'scoped memory for tpu_custom_call.1']
    %10 = vsyncpa [#allocation3], 0
    // Predicated region
    $region2: #{tpu_custom_call.1} parent=1 // pred_check
      _
    $region3: #{tpu_custom_call.1} parent=1 // pred_check_branch
      %12 = sbr.rel (0) target = $region5
    $region4: #{tpu_custom_call.1} parent=1 // pred_region
      _
    $region5: #{tpu_custom_call.1} parent=1 // pred_fallthru
      _
    // Predicated region
    $region6: #{tpu_custom_call.1} parent=1 // pred_check
      _
    $region7: #{tpu_custom_call.1} parent=1 // pred_check_branch
      %14 = sbr.rel (0) target = $region9
    $region8: #{tpu_custom_call.1} parent=1 // pred_region
      _
    $region9: #{tpu_custom_call.1} parent=1 // pred_fallthru
      _
    // Predicated region
    $region10: #{tpu_custom_call.1} parent=1 // pred_check
      _
    $region11: #{tpu_custom_call.1} parent=1 // pred_check_branch
      %16 = sbr.rel (0) target = $region13
    $region12: #{tpu_custom_call.1} parent=1 // pred_region
      _
    $region13: #{tpu_custom_call.1} parent=1 // pred_fallthru
      _
    // Predicated region
    $region14: #{tpu_custom_call.1} parent=1 // pred_check
      _
    $region15: #{tpu_custom_call.1} parent=1 // pred_check_branch
      %18 = sbr.rel (0) target = $region17
    $region16: #{tpu_custom_call.1} parent=1 // pred_region
      _
    $region17: #{tpu_custom_call.1} parent=1 // pred_fallthru
      _
    // Predicated region
    $region18: #{tpu_custom_call.1} parent=1 // pred_check
      _
    $region19: #{tpu_custom_call.1} parent=1 // pred_check_branch
      %20 = sbr.rel (0) target = $region21
    $region20: #{tpu_custom_call.1} parent=1 // pred_region
      _
    $region21: #{tpu_custom_call.1} parent=1 // pred_fallthru
      _
    %v21 = vld [vmem:[%s0] sm:$0x3]
    %v22 = vld [vmem:[%s1] sm:$0xff]
    %v23 = vld [vmem:[%s2] sm:$0x1]
    %v25 = vperm.slane %v23, 0
    %vm27 = vcmask 64512
    %v29 = vsel %vm27, %v21, 0
    %31 = vmatpush.msra.mxu0 0.0
    %32 = vmatpush.msra.mxu0 0.0
    %33 = vmatpush.msra.mxu0 0.0
    %34 = vmatpush.msra.mxu0 0.0
    %35 = vmatpush.msra.mxu0 0.0
    %36 = vmatpush.msra.mxu0 0.0
    %37 = vmatpush.msra.mxu0 0.0
    %38 = vmatpush.msra.mxu0 0.0
    %39 = vmatpush.msra.mxu0 0.0
    %40 = vmatpush.msra.mxu0 0.0
    %41 = vmatpush.msra.mxu0 0.0
    %42 = vmatpush.msra.mxu0 0.0
    %43 = vmatpush.msra.mxu0 0.0
    %44 = vmatpush.msra.mxu0 0.0
    %45 = vmatpush.msra.mxu0 0.0
    %46 = vmatpush.msra.mxu0 %v22
    %47 = vmatmul.f32.gmra.mxu0 %v29
    %v48 = vpop.f32.mrf.mxu0
    %v49 = vadd.f32 %v25, %v48
    %50 = vdwg.mxu0
    %v51 = vtanh.pop %v49
    %v52 = vld [vmem:[%s3] sm:$0xff]
    %v53 = vld [vmem:[%s3 + $0x8] sm:$0xff]
    %v54 = vld [vmem:[%s3 + $0x10] sm:$0xff]
    %v55 = vld [vmem:[%s3 + $0x18] sm:$0xff]
    %v56 = vld [vmem:[%s3 + $0x20] sm:$0xff]
    %v57 = vld [vmem:[%s3 + $0x28] sm:$0xff]
    %v58 = vld [vmem:[%s3 + $0x30] sm:$0xff]
    %v59 = vld [vmem:[%s3 + $0x38] sm:$0xff]
    %v60 = vld [vmem:[%s3 + $0x40] sm:$0xff]
    %v61 = vld [vmem:[%s3 + $0x48] sm:$0xff]
    %v62 = vld [vmem:[%s3 + $0x50] sm:$0xff]
    %v63 = vld [vmem:[%s3 + $0x58] sm:$0xff]
    %v64 = vld [vmem:[%s3 + $0x60] sm:$0xff]
    %v65 = vld [vmem:[%s3 + $0x68] sm:$0xff]
    %v66 = vld [vmem:[%s3 + $0x70] sm:$0xff]
    %v67 = vld [vmem:[%s3 + $0x78] sm:$0xff]
    %v68 = vld [vmem:[%s4] sm:$0x1]
    %v70 = vperm.slane %v68, 0
    %72 = vmatpush.msra.mxu0 %v67
    %73 = vmatpush.msra.mxu0 %v66
    %74 = vmatpush.msra.mxu0 %v65
    %75 = vmatpush.msra.mxu0 %v64
    %76 = vmatpush.msra.mxu0 %v63
    %77 = vmatpush.msra.mxu0 %v62
    %78 = vmatpush.msra.mxu0 %v61
    %79 = vmatpush.msra.mxu0 %v60
    %80 = vmatpush.msra.mxu0 %v59
    %81 = vmatpush.msra.mxu0 %v58
    %82 = vmatpush.msra.mxu0 %v57
    %83 = vmatpush.msra.mxu0 %v56
    %84 = vmatpush.msra.mxu0 %v55
    %85 = vmatpush.msra.mxu0 %v54
    %86 = vmatpush.msra.mxu0 %v53
    %87 = vmatpush.msra.mxu0 %v52
    %88 = vmatmul.f32.gmra.mxu0 %v51
    %v89 = vpop.f32.mrf.mxu0
    %v90 = vadd.f32 %v70, %v89
    %91 = vdwg.mxu0
    %vm92 = vcmask 386048
    %93 = vst.msk [vmem:[#allocation2] sm:$0x3] %vm92, %v90
    // Predicated region
    $region22: #{tpu_custom_call.1} parent=1 // pred_check
      _
    $region23: #{tpu_custom_call.1} parent=1 // pred_check_branch
      %95 = sbr.rel (0) target = $region25
    $region24: #{tpu_custom_call.1} parent=1 // pred_region
      %97 = vsyncadd [#allocation3], 0
      %s99 = sshll.u32 [#allocation2], 4
      %s100 = int_to_ptr.vmem [resolvable:$true] %s99
      %s101 = sshll.u32 %s5, 4
      %s102 = int_to_ptr.hbm [resolvable:$true] %s101
      %104 = dma.vmem_to_hbm [thread:$0]  %s100, 32, %s102, [#allocation3]
    $region25: #{tpu_custom_call.1} parent=1 // pred_fallthru
      _
    // Predicated region
    $region26: #{tpu_custom_call.1} parent=1 // pred_check
      _
    $region27: #{tpu_custom_call.1} parent=1 // pred_check_branch
      %106 = sbr.rel (0) target = $region29
    $region28: #{tpu_custom_call.1} parent=1 // pred_region
      %108 = dma.done [#allocation3], 32
    $region29: #{tpu_custom_call.1} parent=1 // pred_fallthru
      _
    %109 = vsyncpa [#allocation3], 1

</llo_original>
